<compile_context>
chip_gen: v7x
topology: tpu7x:2x2x1
jax: 0.10.0
libtpu: 0.0.40
codegen_flags: <defaults>
</compile_context>

<pallas_src>
import jax
import jax.numpy as jnp
from jax.experimental import pallas as pl
from jax.experimental.pallas import tpu as pltpu


def _attention_kernel(scores_ref, len_ref, x_ref, o_ref):
    """One grid step = TB batch rows.

    scores_ref : VMEM (1, S)   f32  -- softmax(weights), precomputed in wrapper
    len_ref    : VMEM (TB, 1)  i32  -- valid sequence length per row
    x_ref      : VMEM (TB, S, D)    -- input tile in its native dtype
    o_ref      : VMEM (TB, D)       -- per-row weighted sums
    """
    TB, S, D = x_ref.shape

    # mask of valid sequence positions, built once per block
    lens = len_ref[...]                                     # (TB, 1) int32
    seq = jax.lax.broadcasted_iota(jnp.int32, (TB, S), 1)   # (TB, S)
    mask = seq < lens                                       # (TB, S) bool

    # masked softmax scores (scores are batch-independent, just broadcast)
    w = jnp.where(mask, scores_ref[...], 0.0)               # (TB, S) f32

    # weighted sum over the sequence axis on the VPU/XLU; a tiny matmul would
    # waste the MXU and add result-FIFO latency. Accumulate in f32.
    x = x_ref[...].astype(jnp.float32)                      # (TB, S, D)
    acc = jnp.sum(x * w[:, :, None], axis=1)                # (TB, D) f32
    o_ref[...] = acc.astype(o_ref.dtype)


def _pick_batch_tile(B, S, D, itemsize):
    """Largest sublane-aligned batch tile keeping each input buffer ~<= 4 MiB.

    4 MiB per buffer keeps the double-buffered pipeline comfortably inside
    even v5e's 16 MiB default scoped VMEM and v7x's 64 MiB physical ceiling,
    so no vmem_limit_bytes override is required.
    """
    budget = 4 * 1024 * 1024
    per_row = max(1, S * D * itemsize)
    tb = budget // per_row
    if tb >= B:
        return B                        # whole batch in a single grid step
    return int(max(8, (tb // 8) * 8))   # multiple of 8 for sublane alignment


def attention_forward(x, lengths, weights):
    """x: (B, S, D), lengths: (B,) int, weights: (S,) -> (B, D) in x.dtype."""
    B, S, D = x.shape

    # Softmax over the learned weights does not depend on the batch: do it
    # once here instead of once per grid iteration inside the kernel.
    scores = jax.nn.softmax(weights.astype(jnp.float32)).reshape(1, S)

    TB = _pick_batch_tile(B, S, D, x.dtype.itemsize)
    num_blocks = pl.cdiv(B, TB)

    # Pad the (tiny) lengths vector so every block read stays in bounds.
    # Padded rows get length 0; their (out-of-bounds) output rows are dropped
    # by Pallas, and each row's result depends only on its own input row.
    lens = lengths.astype(jnp.int32)
    B_pad = num_blocks * TB
    if B_pad != B:
        lens = jnp.pad(lens, (0, B_pad - B))
    lens2d = lens.reshape(B_pad, 1)

    grid_spec = pltpu.PrefetchScalarGridSpec(
        num_scalar_prefetch=0,
        grid=(num_blocks,),
        in_specs=[
            pl.BlockSpec((1, S), lambda b: (0, 0)),         # softmax scores
            pl.BlockSpec((TB, 1), lambda b: (b, 0)),        # lengths
            pl.BlockSpec((TB, S, D), lambda b: (b, 0, 0)),  # input tile
        ],
        out_specs=pl.BlockSpec((TB, D), lambda b: (b, 0)),
    )

    # TODO(synk): for D < 128 the (TB, D) output store is a masked partial
    # store; making it lane-dense would require a caller-visible layout change.
    return pl.pallas_call(
        _attention_kernel,
        out_shape=jax.ShapeDtypeStruct((B, D), x.dtype),
        grid_spec=grid_spec,
        compiler_params=pltpu.CompilerParams(
            dimension_semantics=("parallel",)),  # independent batch tiles
    )(scores, lens2d, x)


def attention_reference(x, lengths, weights):
    """Pure-JAX reference mirroring the PyTorch forward."""
    scores = jax.nn.softmax(weights.astype(jnp.float32))          # (S,)
    S = x.shape[1]
    mask = jnp.arange(S)[None, :] < lengths[:, None]              # (B, S)
    w = jnp.where(mask, scores[None, :], 0.0)                     # (B, S)
    out = jnp.sum(x.astype(jnp.float32) * w[:, :, None], axis=1)  # (B, D)
    return out.astype(x.dtype)


if __name__ == "__main__":
    # Small shapes implied by the module: batch=2, max_seq_len=8, lstm_dim=32
    B, S, D = 2, 8, 32
    key = jax.random.PRNGKey(0)
    k_w, k_x = jax.random.split(key)

    weights = jax.random.uniform(k_w, (S,), dtype=jnp.float32)   # nn.init.uniform_
    x = jax.random.normal(k_x, (B, S, D), dtype=jnp.float32)
    lengths = jnp.array([5, 8], dtype=jnp.int32)

    out = jax.block_until_ready(attention_forward(x, lengths, weights))
    ref = attention_reference(x, lengths, weights)

    assert out.shape == (B, D)
    assert jnp.allclose(out, ref, atol=1e-5, rtol=1e-5), "mismatch vs reference"

    print("KERNEL_OK")
</pallas_src>

<mosaic_0001>
module attributes {stable_mosaic.version = 11 : i64} {
  func.func @_attention_kernel(%arg0: i32, %arg1: memref<1x8xf32, #tpu.memory_space<vmem>>, %arg2: memref<2x1xi32, #tpu.memory_space<vmem>>, %arg3: memref<2x8x32xf32, #tpu.memory_space<vmem>>, %arg4: memref<2x32xf32, #tpu.memory_space<vmem>>) attributes {dimension_semantics = [#tpu.dimension_semantics<parallel>], iteration_bounds = array<i64: 1>, scalar_prefetch = 0 : i64, scratch_operands = 0 : i64, tpu.core_type = #tpu.core_type<tc>, window_params = [{pipeline_mode = #tpu.pipeline_mode<synchronous>, transform_indices = @transform_0, window_bounds = array<i64: 1, 8>}, {transform_indices = @transform_1, window_bounds = array<i64: 2, 1>}, {transform_indices = @transform_2, window_bounds = array<i64: 2, 8, 32>}, {transform_indices = @transform_3, window_bounds = array<i64: 2, 32>}]} {
    %c0 = arith.constant 0 : index
    %c0_0 = arith.constant 0 : index
    %0 = vector.load %arg2[%c0, %c0_0] : memref<2x1xi32, #tpu.memory_space<vmem>>, vector<2x1xi32>
    %1 = tpu.iota {dimensions = array<i32: 1>} : vector<2x8xi32>
    %2 = vector.broadcast %0 : vector<2x1xi32> to vector<2x8xi32>
    %3 = arith.cmpi slt, %1, %2 : vector<2x8xi32>
    %c0_1 = arith.constant 0 : index
    %c0_2 = arith.constant 0 : index
    %4 = vector.load %arg1[%c0_1, %c0_2] : memref<1x8xf32, #tpu.memory_space<vmem>>, vector<1x8xf32>
    %cst = arith.constant 0.000000e+00 : f32
    %5 = vector.shape_cast %4 : vector<1x8xf32> to vector<1x8xf32>
    %6 = vector.broadcast %5 : vector<1x8xf32> to vector<2x8xf32>
    %7 = vector.broadcast %cst : f32 to vector<2x8xf32>
    %8 = arith.select %3, %6, %7 : vector<2x8xi1>, vector<2x8xf32>
    %c0_3 = arith.constant 0 : index
    %c0_4 = arith.constant 0 : index
    %c0_5 = arith.constant 0 : index
    %9 = vector.load %arg3[%c0_3, %c0_4, %c0_5] : memref<2x8x32xf32, #tpu.memory_space<vmem>>, vector<2x8x32xf32>
    %10 = vector.shape_cast %8 : vector<2x8xf32> to vector<2x8x1xf32>
    %11 = vector.broadcast %10 : vector<2x8x1xf32> to vector<2x8x32xf32>
    %12 = arith.mulf %9, %11 : vector<2x8x32xf32>
    %cst_6 = arith.constant dense<0.000000e+00> : vector<2x32xf32>
    %13 = vector.multi_reduction <add>, %12, %cst_6 [1] : vector<2x8x32xf32> to vector<2x32xf32>
    %c0_7 = arith.constant 0 : index
    %c0_8 = arith.constant 0 : index
    %14 = vector.load %arg4[%c0_7, %c0_8] : memref<2x32xf32, #tpu.memory_space<vmem>>, vector<2x32xf32>
    tpu.vector_store %arg4[%c0_7, %c0_8], %13 {strides = array<i32>} : memref<2x32xf32, #tpu.memory_space<vmem>>, vector<2x32xf32>,
    return
  }
  func.func @transform_0(%arg0: i32) -> (i32, i32) {
    %c0_i32 = arith.constant 0 : i32
    %c0_i32_0 = arith.constant 0 : i32
    %c0_i32_1 = arith.constant 0 : i32
    return %c0_i32, %c0_i32_0 : i32, i32
  }
  func.func @transform_1(%arg0: i32) -> (i32, i32) {
    %c0_i32 = arith.constant 0 : i32
    %c0_i32_0 = arith.constant 0 : i32
    return %arg0, %c0_i32 : i32, i32
  }
  func.func @transform_2(%arg0: i32) -> (i32, i32, i32) {
    %c0_i32 = arith.constant 0 : i32
    %c0_i32_0 = arith.constant 0 : i32
    %c0_i32_1 = arith.constant 0 : i32
    return %arg0, %c0_i32, %c0_i32_0 : i32, i32, i32
  }
  func.func @transform_3(%arg0: i32) -> (i32, i32) {
    %c0_i32 = arith.constant 0 : i32
    %c0_i32_0 = arith.constant 0 : i32
    return %arg0, %c0_i32 : i32, i32
  }
}

</mosaic_0001>

<llo_original>
// kernel: tpu_custom_call.1
$region0: #{tpu_custom_call.1}
  #allocation0 [shape = 'u32[]', space=smem, size = 0x4, offset = 0x4, fixed_abs, tag = 'smem constant byte address 0x4 - core index']
  #allocation1 [shape = 'u32[144,128]{1,0:T(1,128)}', space=vmem, size = 0x12000, scoped, tag = 'internal scratch']
  %s0 = inlined_call_operand.vmem [shape: f32[1,8], index: 0, kind: input, shape index: {}]
  %s1 = inlined_call_operand.vmem [shape: s32[2,1], index: 1, kind: input, shape index: {}]
  %s2 = inlined_call_operand.hbm [shape: f32[2,8,32], index: 2, kind: input, shape index: {}]
  %s3 = inlined_call_operand.hbm [shape: f32[2,32], index: 3, kind: output, shape index: {}]
  %s4 = sld [smem:[#allocation0]]
  $region26: #{tpu_custom_call.1} parent=0
    _
  %s6 = ssub.s32 1, %s4
  %s7 = scalar_select 0, %s6, %s4
  $region1: #{tpu_custom_call.1} parent=0
    #allocation2 [shape = 'u8[8192]{0}', space=vmem, size = 0x2000, scoped, tag = 'input window, operand 2, single buffered']
    #allocation3 [shape = 's32[1]{0}', space=sflag, size = 0x4, scoped, tag = 'scoped memory for tpu_custom_call.1']
    #allocation4 [shape = 's32[1]{0}', space=sflag, size = 0x4, scoped, tag = 'scoped memory for tpu_custom_call.1']
    #allocation5 [shape = 'u8[1024]{0}', space=vmem, size = 0x400, scoped, tag = 'output window, operand 0, single buffered']
    %8 = vsyncpa [#allocation3], 0
    %9 = vsyncpa [#allocation4], 0
    // Predicated region
    $region2: #{tpu_custom_call.1} parent=1 // pred_check
      _
    $region3: #{tpu_custom_call.1} parent=1 // pred_check_branch
      %11 = sbr.rel (0) target = $region5
    $region4: #{tpu_custom_call.1} parent=1 // pred_region
      _
    $region5: #{tpu_custom_call.1} parent=1 // pred_fallthru
      _
    // Predicated region
    $region6: #{tpu_custom_call.1} parent=1 // pred_check
      _
    $region7: #{tpu_custom_call.1} parent=1 // pred_check_branch
      %13 = sbr.rel (0) target = $region9
    $region8: #{tpu_custom_call.1} parent=1 // pred_region
      _
    $region9: #{tpu_custom_call.1} parent=1 // pred_fallthru
      _
    // Predicated region
    $region10: #{tpu_custom_call.1} parent=1 // pred_check
      _
    $region11: #{tpu_custom_call.1} parent=1 // pred_check_branch
      %15 = sbr.rel (0) target = $region13
    $region12: #{tpu_custom_call.1} parent=1 // pred_region
      %s17 = ssub.s32 256, 256
      %18 = vsyncadd [#allocation3], %s17
      %s19 = sshll.u32 [#allocation2], 4
      %s20 = int_to_ptr.vmem [resolvable:$true] %s19
      %25 = dma.hbm_to_vmem [thread:$0]  %s2, 256, %s20, [#allocation3], 128, 128, 8
    $region13: #{tpu_custom_call.1} parent=1 // pred_fallthru
      _
    // Predicated region
    $region14: #{tpu_custom_call.1} parent=1 // pred_check
      _
    $region15: #{tpu_custom_call.1} parent=1 // pred_check_branch
      %27 = sbr.rel (0) target = $region17
    $region16: #{tpu_custom_call.1} parent=1 // pred_region
      %28 = dma.done [#allocation3], 256
    $region17: #{tpu_custom_call.1} parent=1 // pred_fallthru
      _
    %v29 = vld [vmem:[%s1] sm:$0x3]
    %v30 = vlaneseq
    %v31 = vand.u32 %v30, 127
    %32 = vset.pattern.permute.xlu0 0
    %33 = vperm.xlu0 %32, %v29
    %v34 = vpop.permute.xlu0 %33
    %vm35 = vcmp.lt.s32.totalorder %v31, %v34
    %v36 = vld [vmem:[%s0] sm:$0x1]
    %v38 = vlaneseq
    %v39 = vshrl.u32 %v38, 7
    %v40 = vsub.s32 0, %v39
    %v41 = vrot.slane %v36, %v40
    %v43 = vsel %vm35, %v41, 0.0
    %v44 = vld [vmem:[#allocation2] sm:$0xff]
    %v45 = vld [vmem:[#allocation2 + $0x8] sm:$0xff]
    %v46 = vlaneseq
    %v47 = vshrl.u32 %v46, 7
    %v48 = vsub.s32 0, %v47
    %v49 = vrot.slane %v43, %v48
    %51 = vbcast.lane.b32.xlu0 %v49, 256
    %v52 = vpop.permute.xlu0 %51
    %v53 = vlaneseq
    %v54 = vshrl.u32 %v53, 7
    %v55 = vsub.s32 1, %v54
    %v56 = vrot.slane %v43, %v55
    %58 = vbcast.lane.b32.xlu0 %v56, 256
    %v59 = vpop.permute.xlu0 %58
    %v60 = vmul.f32 %v44, %v52
    %v61 = vmul.f32 %v45, %v59
    %vm62 = vcmask 261120
    %v63 = vsel %vm62, %v60, 0.0
    %v64 = vrot.slane %v63, 4
    %v65 = vadd.f32 %v63, %v64
    %v66 = vrot.slane %v65, 2
    %v67 = vadd.f32 %v65, %v66
    %v68 = vrot.slane %v67, 1
    %v69 = vadd.f32 %v67, %v68
    %v70 = vsel %vm62, %v61, 0.0
    %v71 = vrot.slane %v70, 4
    %v72 = vadd.f32 %v70, %v71
    %v73 = vrot.slane %v72, 2
    %v74 = vadd.f32 %v72, %v73
    %v75 = vrot.slane %v74, 1
    %v76 = vadd.f32 %v74, %v75
    %vm79 = vcmask 1041409
    %v80 = vsel %vm79, %v76, %v69
    %vm82 = vcmask 254976
    %83 = vst.msk [vmem:[#allocation5] sm:$0x3] %vm82, %v80
    // Predicated region
    $region18: #{tpu_custom_call.1} parent=1 // pred_check
      _
    $region19: #{tpu_custom_call.1} parent=1 // pred_check_branch
      %85 = sbr.rel (0) target = $region21
    $region20: #{tpu_custom_call.1} parent=1 // pred_region
      %s87 = ssub.s32 32, 32
      %88 = vsyncadd [#allocation4], %s87
      %s90 = sshll.u32 [#allocation5], 4
      %s91 = int_to_ptr.vmem [resolvable:$true] %s90
      %93 = dma.vmem_to_hbm [thread:$0]  %s91, 32, %s3, [#allocation4]
    $region21: #{tpu_custom_call.1} parent=1 // pred_fallthru
      _
    // Predicated region
    $region22: #{tpu_custom_call.1} parent=1 // pred_check
      _
    $region23: #{tpu_custom_call.1} parent=1 // pred_check_branch
      %95 = sbr.rel (0) target = $region25
    $region24: #{tpu_custom_call.1} parent=1 // pred_region
      %96 = dma.done [#allocation4], 32
    $region25: #{tpu_custom_call.1} parent=1 // pred_fallthru
      _
    %97 = vsyncpa [#allocation3], 1
    %98 = vsyncpa [#allocation4], 1

</llo_original>
